<compile_context>
chip_gen: v5e
topology: v5e:2x2
jax: 0.10.0
libtpu: 0.0.40
codegen_flags: <defaults>
</compile_context>

<pallas_src>
import functools

import jax
import jax.numpy as jnp
from jax.experimental import pallas as pl
from jax.experimental.pallas import tpu as pltpu

LANES = 128
SUB_ROWS = 64          # in-kernel strip-mining chunk (8 vregs per input chunk)
MAX_TILE_ROWS = 2048   # 2048*128*4B = 1 MiB per input per block


def _round_up(x, m):
    return (x + m - 1) // m * m


def _accuracy_kernel(tp_ref, fp_ref, fn_ref, tn_ref, out_ref,
                     num_acc, rest_acc, *, valid_rows, block_rows, sub_rows,
                     mask_tail):
    i = pl.program_id(0)
    nsteps = pl.num_programs(0)
    acc_dtype = num_acc.dtype
    groups = sub_rows // 8

    @pl.when(i == 0)
    def _init():
        num_acc[...] = jnp.zeros_like(num_acc)
        rest_acc[...] = jnp.zeros_like(rest_acc)

    def accumulate(masked):
        # Strip-mine the (block_rows, LANES) block into sub_rows-row chunks to
        # keep live vregs small, folding each chunk into the (8, 128) vreg
        # accumulators with pure-VPU adds (no per-step cross-lane reduction).
        for r0 in range(0, block_rows, sub_rows):
            tp = tp_ref[pl.ds(r0, sub_rows), :].astype(acc_dtype)
            tn = tn_ref[pl.ds(r0, sub_rows), :].astype(acc_dtype)
            num = tp + tn                      # numerator (and denominator)
            fp = fp_ref[pl.ds(r0, sub_rows), :].astype(acc_dtype)
            fn_ = fn_ref[pl.ds(r0, sub_rows), :].astype(acc_dtype)
            rest = fp + fn_                    # denominator-only part
            if masked:
                # Mask rows beyond the real data in the partial edge block
                # (their DMA'd contents are undefined).
                row = (jax.lax.broadcasted_iota(jnp.int32, (sub_rows, LANES), 0)
                       + i * block_rows + r0)
                valid = row < valid_rows
                num = jnp.where(valid, num, 0)
                rest = jnp.where(valid, rest, 0)
            num_acc[...] += jnp.sum(num.reshape(groups, 8, LANES), axis=0)
            rest_acc[...] += jnp.sum(rest.reshape(groups, 8, LANES), axis=0)

    if mask_tail:
        @pl.when(i != nsteps - 1)
        def _steady():
            accumulate(False)

        @pl.when(i == nsteps - 1)
        def _tail():
            accumulate(True)
    else:
        accumulate(False)

    @pl.when(i == nsteps - 1)
    def _finalize():
        s_num = jnp.sum(num_acc[...]).astype(jnp.float32)            # TP + TN
        s_den = s_num + jnp.sum(rest_acc[...]).astype(jnp.float32)   # TP+FP+FN+TN
        out_ref[0] = jnp.where(s_den != 0.0, s_num / s_den, 0.0)


def micro_accuracy(tp, fp, fn, tn, *, max_tile_rows=MAX_TILE_ROWS):
    """Pallas-backed micro-averaged accuracy from confusion-statistic tensors."""
    assert tp.shape == fp.shape == fn.shape == tn.shape
    n = tp.size
    if n == 0:
        return jnp.float32(0.0)

    common = jnp.result_type(tp, fp, fn, tn)
    acc_dtype = jnp.float32 if jnp.issubdtype(common, jnp.floating) else jnp.int32

    def prep(x):
        x = x.reshape(-1)
        pad = (-n) % LANES
        if pad:
            # Only non-128-multiple sizes pay this single copy (zeros are
            # neutral for the sums).  Lane-aligned sizes are reshape-only.
            x = jnp.pad(x, (0, pad))
        return x.reshape(-1, LANES)

    tp2, fp2, fn2, tn2 = (prep(x) for x in (tp, fp, fn, tn))
    rows = tp2.shape[0]

    max_tile_rows = max(SUB_ROWS, (max_tile_rows // SUB_ROWS) * SUB_ROWS)
    block_rows = min(max_tile_rows, _round_up(rows, SUB_ROWS))
    grid_steps = pl.cdiv(rows, block_rows)
    mask_tail = (rows % block_rows) != 0

    kernel = functools.partial(
        _accuracy_kernel,
        valid_rows=rows,
        block_rows=block_rows,
        sub_rows=SUB_ROWS,
        mask_tail=mask_tail,
    )

    out = pl.pallas_call(
        kernel,
        out_shape=jax.ShapeDtypeStruct((1,), jnp.float32),
        grid_spec=pltpu.PrefetchScalarGridSpec(
            num_scalar_prefetch=0,
            grid=(grid_steps,),
            in_specs=[pl.BlockSpec((block_rows, LANES), lambda i: (i, 0))] * 4,
            out_specs=pl.BlockSpec(memory_space=pltpu.SMEM),
            scratch_shapes=[
                pltpu.VMEM((8, LANES), acc_dtype),   # tp + tn accumulator
                pltpu.VMEM((8, LANES), acc_dtype),   # fp + fn accumulator
            ],
        ),
        compiler_params=pltpu.CompilerParams(
            dimension_semantics=("arbitrary",),
        ),
    )(tp2, fp2, fn2, tn2)
    return out[0]


def _reference(tp, fp, fn, tn):
    tp_s = jnp.sum(tp).astype(jnp.float32)
    fp_s = jnp.sum(fp).astype(jnp.float32)
    fn_s = jnp.sum(fn).astype(jnp.float32)
    tn_s = jnp.sum(tn).astype(jnp.float32)
    den = tp_s + fp_s + fn_s + tn_s
    return jnp.where(den != 0.0, (tp_s + tn_s) / den, 0.0)


if __name__ == "__main__":
    key = jax.random.PRNGKey(0)
    ks = jax.random.split(key, 12)

    # Case 1: typical smp.get_stats output shape (batch=4, num_classes=32),
    # int32 counts.  128 elements -> lane-aligned (copy-free), single block,
    # masked partial rows.
    shape1 = (4, 32)
    tp1, fp1, fn1, tn1 = (jax.random.randint(k, shape1, 0, 100, dtype=jnp.int32)
                          for k in ks[0:4])
    acc1 = jax.block_until_ready(micro_accuracy(tp1, fp1, fn1, tn1))
    ref1 = _reference(tp1, fp1, fn1, tn1)
    assert jnp.allclose(acc1, ref1, atol=1e-6, rtol=1e-6), (acc1, ref1)

    # Case 2: non-lane-aligned element count (pad fallback path), float inputs
    # (float32 accumulation path).
    shape2 = (3, 5, 7)
    tp2, fp2, fn2, tn2 = (jax.random.uniform(k, shape2, dtype=jnp.float32) * 10.0
                          for k in ks[4:8])
    acc2 = jax.block_until_ready(micro_accuracy(tp2, fp2, fn2, tn2))
    ref2 = _reference(tp2, fp2, fn2, tn2)
    assert jnp.allclose(acc2, ref2, atol=1e-5, rtol=1e-5), (acc2, ref2)

    # Case 3: multi-step grid accumulation + last-step row masking, exercised
    # cheaply by forcing small tiles (rows=200, block_rows=64 -> grid=4, last
    # block has only 8 valid rows).
    shape3 = (200, 128)
    tp3, fp3, fn3, tn3 = (jax.random.randint(k, shape3, 0, 50, dtype=jnp.int32)
                          for k in ks[8:12])
    acc3 = jax.block_until_ready(
        micro_accuracy(tp3, fp3, fn3, tn3, max_tile_rows=64))
    ref3 = _reference(tp3, fp3, fn3, tn3)
    assert jnp.allclose(acc3, ref3, atol=1e-6, rtol=1e-6), (acc3, ref3)

    print("KERNEL_OK")
</pallas_src>

<mosaic_0001>
module attributes {stable_mosaic.version = 11 : i64} {
  func.func @_accuracy_kernel(%arg0: i32, %arg1: memref<64x128xi32, #tpu.memory_space<vmem>>, %arg2: memref<64x128xi32, #tpu.memory_space<vmem>>, %arg3: memref<64x128xi32, #tpu.memory_space<vmem>>, %arg4: memref<64x128xi32, #tpu.memory_space<vmem>>, %arg5: memref<1xf32, #tpu.memory_space<smem>>, %arg6: memref<8x128xi32, #tpu.memory_space<vmem>>, %arg7: memref<8x128xi32, #tpu.memory_space<vmem>>) attributes {dimension_semantics = [#tpu.dimension_semantics<arbitrary>], iteration_bounds = array<i64: 1>, scalar_prefetch = 0 : i64, scratch_operands = 2 : i64, tpu.core_type = #tpu.core_type<tc>, window_params = [{transform_indices = @transform_0, window_bounds = array<i64: 64, 128>}, {transform_indices = @transform_1, window_bounds = array<i64: 64, 128>}, {transform_indices = @transform_2, window_bounds = array<i64: 64, 128>}, {transform_indices = @transform_3, window_bounds = array<i64: 64, 128>}, {transform_indices = @transform_4, window_bounds = array<i64: 1>}]} {
    %c0_i32 = arith.constant 0 : i32
    %0 = arith.cmpi eq, %arg0, %c0_i32 : i32
    %1 = arith.extui %0 : i1 to i32
    %c0_i32_0 = arith.constant 0 : i32
    %2 = arith.cmpi ne, %1, %c0_i32_0 : i32
    scf.if %2 {
      %c0_i32_7 = arith.constant 0 : i32
      %12 = vector.broadcast %c0_i32_7 : i32 to vector<8x128xi32>
      %c0 = arith.constant 0 : index
      %c0_8 = arith.constant 0 : index
      %13 = vector.load %arg6[%c0, %c0_8] : memref<8x128xi32, #tpu.memory_space<vmem>>, vector<8x128xi32>
      tpu.vector_store %arg6[%c0, %c0_8], %12 {strides = array<i32>} : memref<8x128xi32, #tpu.memory_space<vmem>>, vector<8x128xi32>,
      %c0_i32_9 = arith.constant 0 : i32
      %14 = vector.broadcast %c0_i32_9 : i32 to vector<8x128xi32>
      %c0_10 = arith.constant 0 : index
      %c0_11 = arith.constant 0 : index
      %15 = vector.load %arg7[%c0_10, %c0_11] : memref<8x128xi32, #tpu.memory_space<vmem>>, vector<8x128xi32>
      tpu.vector_store %arg7[%c0_10, %c0_11], %14 {strides = array<i32>} : memref<8x128xi32, #tpu.memory_space<vmem>>, vector<8x128xi32>,
    } else {
    }
    %c0_i32_1 = arith.constant 0 : i32
    %3 = arith.cmpi ne, %arg0, %c0_i32_1 : i32
    %4 = arith.extui %3 : i1 to i32
    %c0_i32_2 = arith.constant 0 : i32
    %5 = arith.cmpi ne, %4, %c0_i32_2 : i32
    scf.if %5 {
      %c0 = arith.constant 0 : index
      %c0_7 = arith.constant 0 : index
      %12 = vector.load %arg1[%c0, %c0_7] : memref<64x128xi32, #tpu.memory_space<vmem>>, vector<64x128xi32>
      %c0_8 = arith.constant 0 : index
      %c0_9 = arith.constant 0 : index
      %13 = vector.load %arg4[%c0_8, %c0_9] : memref<64x128xi32, #tpu.memory_space<vmem>>, vector<64x128xi32>
      %14 = arith.addi %12, %13 : vector<64x128xi32>
      %c0_10 = arith.constant 0 : index
      %c0_11 = arith.constant 0 : index
      %15 = vector.load %arg2[%c0_10, %c0_11] : memref<64x128xi32, #tpu.memory_space<vmem>>, vector<64x128xi32>
      %c0_12 = arith.constant 0 : index
      %c0_13 = arith.constant 0 : index
      %16 = vector.load %arg3[%c0_12, %c0_13] : memref<64x128xi32, #tpu.memory_space<vmem>>, vector<64x128xi32>
      %17 = arith.addi %15, %16 : vector<64x128xi32>
      %c0_14 = arith.constant 0 : index
      %c0_15 = arith.constant 0 : index
      %18 = vector.load %arg6[%c0_14, %c0_15] : memref<8x128xi32, #tpu.memory_space<vmem>>, vector<8x128xi32>
      %19 = vector.shape_cast %14 : vector<64x128xi32> to vector<8x8x128xi32>
      %cst = arith.constant dense<0> : vector<8x128xi32>
      %20 = vector.multi_reduction <add>, %19, %cst [0] : vector<8x8x128xi32> to vector<8x128xi32>
      %21 = arith.addi %18, %20 : vector<8x128xi32>
      %c0_16 = arith.constant 0 : index
      %c0_17 = arith.constant 0 : index
      %22 = vector.load %arg6[%c0_16, %c0_17] : memref<8x128xi32, #tpu.memory_space<vmem>>, vector<8x128xi32>
      tpu.vector_store %arg6[%c0_16, %c0_17], %21 {strides = array<i32>} : memref<8x128xi32, #tpu.memory_space<vmem>>, vector<8x128xi32>,
      %c0_18 = arith.constant 0 : index
      %c0_19 = arith.constant 0 : index
      %23 = vector.load %arg7[%c0_18, %c0_19] : memref<8x128xi32, #tpu.memory_space<vmem>>, vector<8x128xi32>
      %24 = vector.shape_cast %17 : vector<64x128xi32> to vector<8x8x128xi32>
      %cst_20 = arith.constant dense<0> : vector<8x128xi32>
      %25 = vector.multi_reduction <add>, %24, %cst_20 [0] : vector<8x8x128xi32> to vector<8x128xi32>
      %26 = arith.addi %23, %25 : vector<8x128xi32>
      %c0_21 = arith.constant 0 : index
      %c0_22 = arith.constant 0 : index
      %27 = vector.load %arg7[%c0_21, %c0_22] : memref<8x128xi32, #tpu.memory_space<vmem>>, vector<8x128xi32>
      tpu.vector_store %arg7[%c0_21, %c0_22], %26 {strides = array<i32>} : memref<8x128xi32, #tpu.memory_space<vmem>>, vector<8x128xi32>,
    } else {
    }
    %c0_i32_3 = arith.constant 0 : i32
    %6 = arith.cmpi eq, %arg0, %c0_i32_3 : i32
    %7 = arith.extui %6 : i1 to i32
    %c0_i32_4 = arith.constant 0 : i32
    %8 = arith.cmpi ne, %7, %c0_i32_4 : i32
    scf.if %8 {
      %c0 = arith.constant 0 : index
      %c0_7 = arith.constant 0 : index
      %12 = vector.load %arg1[%c0, %c0_7] : memref<64x128xi32, #tpu.memory_space<vmem>>, vector<64x128xi32>
      %c0_8 = arith.constant 0 : index
      %c0_9 = arith.constant 0 : index
      %13 = vector.load %arg4[%c0_8, %c0_9] : memref<64x128xi32, #tpu.memory_space<vmem>>, vector<64x128xi32>
      %14 = arith.addi %12, %13 : vector<64x128xi32>
      %c0_10 = arith.constant 0 : index
      %c0_11 = arith.constant 0 : index
      %15 = vector.load %arg2[%c0_10, %c0_11] : memref<64x128xi32, #tpu.memory_space<vmem>>, vector<64x128xi32>
      %c0_12 = arith.constant 0 : index
      %c0_13 = arith.constant 0 : index
      %16 = vector.load %arg3[%c0_12, %c0_13] : memref<64x128xi32, #tpu.memory_space<vmem>>, vector<64x128xi32>
      %17 = arith.addi %15, %16 : vector<64x128xi32>
      %18 = tpu.iota {dimensions = array<i32: 0>} : vector<64x128xi32>
      %c64_i32 = arith.constant 64 : i32
      %19 = arith.muli %arg0, %c64_i32 : i32
      %20 = vector.broadcast %19 : i32 to vector<64x128xi32>
      %21 = arith.addi %18, %20 : vector<64x128xi32>
      %c0_i32_14 = arith.constant 0 : i32
      %22 = vector.broadcast %c0_i32_14 : i32 to vector<64x128xi32>
      %23 = arith.addi %21, %22 : vector<64x128xi32>
      %c1_i32 = arith.constant 1 : i32
      %24 = vector.broadcast %c1_i32 : i32 to vector<64x128xi32>
      %25 = arith.cmpi slt, %23, %24 : vector<64x128xi32>
      %c0_i32_15 = arith.constant 0 : i32
      %26 = vector.broadcast %c0_i32_15 : i32 to vector<64x128xi32>
      %27 = arith.select %25, %14, %26 : vector<64x128xi1>, vector<64x128xi32>
      %c0_i32_16 = arith.constant 0 : i32
      %28 = vector.broadcast %c0_i32_16 : i32 to vector<64x128xi32>
      %29 = arith.select %25, %17, %28 : vector<64x128xi1>, vector<64x128xi32>
      %c0_17 = arith.constant 0 : index
      %c0_18 = arith.constant 0 : index
      %30 = vector.load %arg6[%c0_17, %c0_18] : memref<8x128xi32, #tpu.memory_space<vmem>>, vector<8x128xi32>
      %31 = vector.shape_cast %27 : vector<64x128xi32> to vector<8x8x128xi32>
      %cst = arith.constant dense<0> : vector<8x128xi32>
      %32 = vector.multi_reduction <add>, %31, %cst [0] : vector<8x8x128xi32> to vector<8x128xi32>
      %33 = arith.addi %30, %32 : vector<8x128xi32>
      %c0_19 = arith.constant 0 : index
      %c0_20 = arith.constant 0 : index
      %34 = vector.load %arg6[%c0_19, %c0_20] : memref<8x128xi32, #tpu.memory_space<vmem>>, vector<8x128xi32>
      tpu.vector_store %arg6[%c0_19, %c0_20], %33 {strides = array<i32>} : memref<8x128xi32, #tpu.memory_space<vmem>>, vector<8x128xi32>,
      %c0_21 = arith.constant 0 : index
      %c0_22 = arith.constant 0 : index
      %35 = vector.load %arg7[%c0_21, %c0_22] : memref<8x128xi32, #tpu.memory_space<vmem>>, vector<8x128xi32>
      %36 = vector.shape_cast %29 : vector<64x128xi32> to vector<8x8x128xi32>
      %cst_23 = arith.constant dense<0> : vector<8x128xi32>
      %37 = vector.multi_reduction <add>, %36, %cst_23 [0] : vector<8x8x128xi32> to vector<8x128xi32>
      %38 = arith.addi %35, %37 : vector<8x128xi32>
      %c0_24 = arith.constant 0 : index
      %c0_25 = arith.constant 0 : index
      %39 = vector.load %arg7[%c0_24, %c0_25] : memref<8x128xi32, #tpu.memory_space<vmem>>, vector<8x128xi32>
      tpu.vector_store %arg7[%c0_24, %c0_25], %38 {strides = array<i32>} : memref<8x128xi32, #tpu.memory_space<vmem>>, vector<8x128xi32>,
    } else {
    }
    %c0_i32_5 = arith.constant 0 : i32
    %9 = arith.cmpi eq, %arg0, %c0_i32_5 : i32
    %10 = arith.extui %9 : i1 to i32
    %c0_i32_6 = arith.constant 0 : i32
    %11 = arith.cmpi ne, %10, %c0_i32_6 : i32
    scf.if %11 {
      %c0 = arith.constant 0 : index
      %c0_7 = arith.constant 0 : index
      %12 = vector.load %arg6[%c0, %c0_7] : memref<8x128xi32, #tpu.memory_space<vmem>>, vector<8x128xi32>
      %13 = vector.shape_cast %12 : vector<8x128xi32> to vector<1x8x128xi32>
      %cst = arith.constant dense<0> : vector<1xi32>
      %14 = vector.multi_reduction <add>, %13, %cst [1, 2] : vector<1x8x128xi32> to vector<1xi32>
      %15 = vector.shape_cast %14 : vector<1xi32> to vector<1x1x1xi32>
      %16 = vector.extract %15[0, 0, 0] : i32 from vector<1x1x1xi32>
      %17 = arith.sitofp %16 : i32 to f32
      %c0_8 = arith.constant 0 : index
      %c0_9 = arith.constant 0 : index
      %18 = vector.load %arg7[%c0_8, %c0_9] : memref<8x128xi32, #tpu.memory_space<vmem>>, vector<8x128xi32>
      %19 = vector.shape_cast %18 : vector<8x128xi32> to vector<1x8x128xi32>
      %cst_10 = arith.constant dense<0> : vector<1xi32>
      %20 = vector.multi_reduction <add>, %19, %cst_10 [1, 2] : vector<1x8x128xi32> to vector<1xi32>
      %21 = vector.shape_cast %20 : vector<1xi32> to vector<1x1x1xi32>
      %22 = vector.extract %21[0, 0, 0] : i32 from vector<1x1x1xi32>
      %23 = arith.sitofp %22 : i32 to f32
      %24 = arith.addf %17, %23 : f32
      %cst_11 = arith.constant 0.000000e+00 : f32
      %25 = arith.cmpf one, %24, %cst_11 : f32
      %26 = arith.divf %17, %24 : f32
      %cst_12 = arith.constant 0.000000e+00 : f32
      %27 = arith.select %25, %26, %cst_12 : f32
      %c0_13 = arith.constant 0 : index
      %28 = memref.load %arg5[%c0_13] : memref<1xf32, #tpu.memory_space<smem>>
      memref.store %27, %arg5[%c0_13] : memref<1xf32, #tpu.memory_space<smem>>
    } else {
    }
    return
  }
  func.func @transform_0(%arg0: i32) -> (i32, i32) {
    %c0_i32 = arith.constant 0 : i32
    %c0_i32_0 = arith.constant 0 : i32
    return %arg0, %c0_i32 : i32, i32
  }
  func.func @transform_1(%arg0: i32) -> (i32, i32) {
    %c0_i32 = arith.constant 0 : i32
    %c0_i32_0 = arith.constant 0 : i32
    return %arg0, %c0_i32 : i32, i32
  }
  func.func @transform_2(%arg0: i32) -> (i32, i32) {
    %c0_i32 = arith.constant 0 : i32
    %c0_i32_0 = arith.constant 0 : i32
    return %arg0, %c0_i32 : i32, i32
  }
  func.func @transform_3(%arg0: i32) -> (i32, i32) {
    %c0_i32 = arith.constant 0 : i32
    %c0_i32_0 = arith.constant 0 : i32
    return %arg0, %c0_i32 : i32, i32
  }
  func.func @transform_4(%arg0: i32) -> i32 {
    %c0_i32 = arith.constant 0 : i32
    %c0_i32_0 = arith.constant 0 : i32
    return %c0_i32 : i32
  }
}

</mosaic_0001>

<llo_original>
// kernel: tpu_custom_call.1
$region0: #{tpu_custom_call.1}
  #allocation0 [shape = 'u32[]', space=smem, size = 0x4, offset = 0x4, fixed_abs, tag = 'smem constant byte address 0x4 - core index']
  #allocation1 [shape = 'u32[72,128]{1,0:T(1,128)}', space=vmem, size = 0x9000, scoped, tag = 'internal scratch']
  #allocation2 [shape = 's32[8,128]{1,0:T(8,128)}', space=vmem, size = 0x1000, scoped, tag = 'scratch operand']
  #allocation3 [shape = 's32[8,128]{1,0:T(8,128)}', space=vmem, size = 0x1000, scoped, tag = 'scratch operand']
  %s0 = inlined_call_operand.hbm [shape: s32[1,128], index: 0, kind: input, shape index: {}]
  %s1 = inlined_call_operand.hbm [shape: s32[1,128], index: 1, kind: input, shape index: {}]
  %s2 = inlined_call_operand.vmem [shape: s32[1,128], index: 2, kind: input, shape index: {}]
  %s3 = inlined_call_operand.vmem [shape: s32[1,128], index: 3, kind: input, shape index: {}]
  %s4 = inlined_call_operand.hbm [shape: f32[1], index: 4, kind: output, shape index: {}]
  %s5 = sld [smem:[#allocation0]]
  $region46: #{tpu_custom_call.1} parent=0
    _
  %s7 = ssub.s32 1, %s5
  %s8 = scalar_select 0, %s7, %s5
  $region1: #{tpu_custom_call.1} parent=0
    #allocation4 [shape = 'u8[32768]{0}', space=vmem, size = 0x8000, scoped, tag = 'input window, operand 0, single buffered']
    #allocation5 [shape = 's32[1]{0}', space=sflag, size = 0x4, scoped, tag = 'scoped memory for tpu_custom_call.1']
    #allocation6 [shape = 's32[1]{0}', space=sflag, size = 0x4, scoped, tag = 'scoped memory for tpu_custom_call.1']
    #allocation7 [shape = 'u8[32768]{0}', space=vmem, size = 0x8000, scoped, tag = 'input window, operand 1, single buffered']
    #allocation8 [shape = 's32[1]{0}', space=sflag, size = 0x4, scoped, tag = 'scoped memory for tpu_custom_call.1']
    #allocation9 [shape = 'u8[512]{0}', space=smem, size = 0x200, scoped, tag = 'output window, operand 0, single buffered']
    %9 = vsyncpa [#allocation5], 0
    %10 = vsyncpa [#allocation8], 0
    %11 = vsyncpa [#allocation6], 0
    // Predicated region
    $region2: #{tpu_custom_call.1} parent=1 // pred_check
      _
    $region3: #{tpu_custom_call.1} parent=1 // pred_check_branch
      %13 = sbr.rel (0) target = $region5
    $region4: #{tpu_custom_call.1} parent=1 // pred_region
      %15 = vsyncadd [#allocation5], 1008
      %s16 = sshll.u32 %s0, 4
      %s17 = int_to_ptr.hbm [resolvable:$true] %s16
      %s18 = sshll.u32 [#allocation4], 4
      %s19 = int_to_ptr.vmem [resolvable:$true] %s18
      %24 = dma.hbm_to_vmem [thread:$0]  %s17, 16, %s19, [#allocation5], 16, 16, 1
    $region5: #{tpu_custom_call.1} parent=1 // pred_fallthru
      _
    // Predicated region
    $region6: #{tpu_custom_call.1} parent=1 // pred_check
      _
    $region7: #{tpu_custom_call.1} parent=1 // pred_check_branch
      %26 = sbr.rel (0) target = $region9
    $region8: #{tpu_custom_call.1} parent=1 // pred_region
      %28 = vsyncadd [#allocation8], 1008
      %s29 = sshll.u32 %s1, 4
      %s30 = int_to_ptr.hbm [resolvable:$true] %s29
      %s31 = sshll.u32 [#allocation7], 4
      %s32 = int_to_ptr.vmem [resolvable:$true] %s31
      %37 = dma.hbm_to_vmem [thread:$0]  %s30, 16, %s32, [#allocation8], 16, 16, 1
    $region9: #{tpu_custom_call.1} parent=1 // pred_fallthru
      _
    // Predicated region
    $region10: #{tpu_custom_call.1} parent=1 // pred_check
      _
    $region11: #{tpu_custom_call.1} parent=1 // pred_check_branch
      %39 = sbr.rel (0) target = $region13
    $region12: #{tpu_custom_call.1} parent=1 // pred_region
      _
    $region13: #{tpu_custom_call.1} parent=1 // pred_fallthru
      _
    // Predicated region
    $region14: #{tpu_custom_call.1} parent=1 // pred_check
      _
    $region15: #{tpu_custom_call.1} parent=1 // pred_check_branch
      %41 = sbr.rel (0) target = $region17
    $region16: #{tpu_custom_call.1} parent=1 // pred_region
      _
    $region17: #{tpu_custom_call.1} parent=1 // pred_fallthru
      _
    // Predicated region
    $region18: #{tpu_custom_call.1} parent=1 // pred_check
      _
    $region19: #{tpu_custom_call.1} parent=1 // pred_check_branch
      %43 = sbr.rel (0) target = $region21
    $region20: #{tpu_custom_call.1} parent=1 // pred_region
      %45 = dma.done [#allocation5], 1024
    $region21: #{tpu_custom_call.1} parent=1 // pred_fallthru
      _
    // Predicated region
    $region22: #{tpu_custom_call.1} parent=1 // pred_check
      _
    $region23: #{tpu_custom_call.1} parent=1 // pred_check_branch
      %47 = sbr.rel (0) target = $region25
    $region24: #{tpu_custom_call.1} parent=1 // pred_region
      %49 = dma.done [#allocation8], 1024
    $region25: #{tpu_custom_call.1} parent=1 // pred_fallthru
      _
    %p50 = scmp.eq.s32.totalorder 0, 0
    // Predicated region
    $region26: #{tpu_custom_call.1} parent=1 // pred_check
      %p51 = pneg %p50
    $region27: #{tpu_custom_call.1} parent=1 // pred_check_branch
      %53 = sbr.rel (%p51) target = $region29
    $region28: #{tpu_custom_call.1} parent=1 // pred_region
      %54 = vst [vmem:[#allocation2] sm:$0xff] 0
      %55 = vst [vmem:[#allocation3] sm:$0xff] 0
    $region29: #{tpu_custom_call.1} parent=1 // pred_fallthru
      _
    %p56 = scmp.ne.s32.totalorder 0, 0
    // Predicated region
    $region30: #{tpu_custom_call.1} parent=1 // pred_check
      %p57 = pneg %p56
    $region31: #{tpu_custom_call.1} parent=1 // pred_check_branch
      %59 = sbr.rel (%p57) target = $region33
    $region32: #{tpu_custom_call.1} parent=1 // pred_region
      %v60 = vld [vmem:[#allocation4] sm:$0xff]
      %v61 = vld [vmem:[#allocation4 + $0x8] sm:$0xff]
      %v62 = vld [vmem:[#allocation4 + $0x10] sm:$0xff]
      %v63 = vld [vmem:[#allocation4 + $0x18] sm:$0xff]
      %v64 = vld [vmem:[#allocation4 + $0x20] sm:$0xff]
      %v65 = vld [vmem:[#allocation4 + $0x28] sm:$0xff]
      %v66 = vld [vmem:[#allocation4 + $0x30] sm:$0xff]
      %v67 = vld [vmem:[#allocation4 + $0x38] sm:$0xff]
      %v68 = vld [vmem:[%s3] sm:$0xff]
      %v69 = vld [vmem:[%s3 + $0x8] sm:$0xff]
      %v70 = vld [vmem:[%s3 + $0x10] sm:$0xff]
      %v71 = vld [vmem:[%s3 + $0x18] sm:$0xff]
      %v72 = vld [vmem:[%s3 + $0x20] sm:$0xff]
      %v73 = vld [vmem:[%s3 + $0x28] sm:$0xff]
      %v74 = vld [vmem:[%s3 + $0x30] sm:$0xff]
      %v75 = vld [vmem:[%s3 + $0x38] sm:$0xff]
      %v76 = vadd.s32 %v60, %v68
      %v77 = vadd.s32 %v61, %v69
      %v78 = vadd.s32 %v62, %v70
      %v79 = vadd.s32 %v63, %v71
      %v80 = vadd.s32 %v64, %v72
      %v81 = vadd.s32 %v65, %v73
      %v82 = vadd.s32 %v66, %v74
      %v83 = vadd.s32 %v67, %v75
      %v84 = vld [vmem:[#allocation7] sm:$0xff]
      %v85 = vld [vmem:[#allocation7 + $0x8] sm:$0xff]
      %v86 = vld [vmem:[#allocation7 + $0x10] sm:$0xff]
      %v87 = vld [vmem:[#allocation7 + $0x18] sm:$0xff]
      %v88 = vld [vmem:[#allocation7 + $0x20] sm:$0xff]
      %v89 = vld [vmem:[#allocation7 + $0x28] sm:$0xff]
      %v90 = vld [vmem:[#allocation7 + $0x30] sm:$0xff]
      %v91 = vld [vmem:[#allocation7 + $0x38] sm:$0xff]
      %v92 = vld [vmem:[%s2] sm:$0xff]
      %v93 = vld [vmem:[%s2 + $0x8] sm:$0xff]
      %v94 = vld [vmem:[%s2 + $0x10] sm:$0xff]
      %v95 = vld [vmem:[%s2 + $0x18] sm:$0xff]
      %v96 = vld [vmem:[%s2 + $0x20] sm:$0xff]
      %v97 = vld [vmem:[%s2 + $0x28] sm:$0xff]
      %v98 = vld [vmem:[%s2 + $0x30] sm:$0xff]
      %v99 = vld [vmem:[%s2 + $0x38] sm:$0xff]
      %v100 = vadd.s32 %v84, %v92
      %v101 = vadd.s32 %v85, %v93
      %v102 = vadd.s32 %v86, %v94
      %v103 = vadd.s32 %v87, %v95
      %v104 = vadd.s32 %v88, %v96
      %v105 = vadd.s32 %v89, %v97
      %v106 = vadd.s32 %v90, %v98
      %v107 = vadd.s32 %v91, %v99
      %v108 = vld [vmem:[#allocation2] sm:$0xff]
      %v109 = vadd.s32 %v76, %v80
      %v110 = vadd.s32 %v77, %v81
      %v111 = vadd.s32 %v78, %v82
      %v112 = vadd.s32 %v79, %v83
      %v113 = vadd.s32 %v109, %v110
      %v114 = vadd.s32 %v111, %v112
      %v115 = vadd.s32 %v113, %v114
      %v116 = vadd.s32 %v108, %v115
      %117 = vst [vmem:[#allocation2] sm:$0xff] %v116
      %v118 = vld [vmem:[#allocation3] sm:$0xff]
      %v119 = vadd.s32 %v100, %v104
      %v120 = vadd.s32 %v101, %v105
      %v121 = vadd.s32 %v102, %v106
      %v122 = vadd.s32 %v103, %v107
      %v123 = vadd.s32 %v119, %v120
      %v124 = vadd.s32 %v121, %v122
      %v125 = vadd.s32 %v123, %v124
      %v126 = vadd.s32 %v118, %v125
      %127 = vst [vmem:[#allocation3] sm:$0xff] %v126
    $region33: #{tpu_custom_call.1} parent=1 // pred_fallthru
      _
    // Predicated region
    $region34: #{tpu_custom_call.1} parent=1 // pred_check
      %p128 = pneg %p50
    $region35: #{tpu_custom_call.1} parent=1 // pred_check_branch
      %130 = sbr.rel (%p128) target = $region37
    $region36: #{tpu_custom_call.1} parent=1 // pred_region
      %v131 = vld [vmem:[#allocation4] sm:$0xff]
      %v132 = vld [vmem:[#allocation4 + $0x8] sm:$0xff]
      %v133 = vld [vmem:[#allocation4 + $0x10] sm:$0xff]
      %v134 = vld [vmem:[#allocation4 + $0x18] sm:$0xff]
      %v135 = vld [vmem:[#allocation4 + $0x20] sm:$0xff]
      %v136 = vld [vmem:[#allocation4 + $0x28] sm:$0xff]
      %v137 = vld [vmem:[#allocation4 + $0x30] sm:$0xff]
      %v138 = vld [vmem:[#allocation4 + $0x38] sm:$0xff]
      %v139 = vld [vmem:[%s3] sm:$0xff]
      %v140 = vld [vmem:[%s3 + $0x8] sm:$0xff]
      %v141 = vld [vmem:[%s3 + $0x10] sm:$0xff]
      %v142 = vld [vmem:[%s3 + $0x18] sm:$0xff]
      %v143 = vld [vmem:[%s3 + $0x20] sm:$0xff]
      %v144 = vld [vmem:[%s3 + $0x28] sm:$0xff]
      %v145 = vld [vmem:[%s3 + $0x30] sm:$0xff]
      %v146 = vld [vmem:[%s3 + $0x38] sm:$0xff]
      %v147 = vadd.s32 %v131, %v139
      %v148 = vadd.s32 %v132, %v140
      %v149 = vadd.s32 %v133, %v141
      %v150 = vadd.s32 %v134, %v142
      %v151 = vadd.s32 %v135, %v143
      %v152 = vadd.s32 %v136, %v144
      %v153 = vadd.s32 %v137, %v145
      %v154 = vadd.s32 %v138, %v146
      %v155 = vld [vmem:[#allocation7] sm:$0xff]
      %v156 = vld [vmem:[#allocation7 + $0x8] sm:$0xff]
      %v157 = vld [vmem:[#allocation7 + $0x10] sm:$0xff]
      %v158 = vld [vmem:[#allocation7 + $0x18] sm:$0xff]
      %v159 = vld [vmem:[#allocation7 + $0x20] sm:$0xff]
      %v160 = vld [vmem:[#allocation7 + $0x28] sm:$0xff]
      %v161 = vld [vmem:[#allocation7 + $0x30] sm:$0xff]
      %v162 = vld [vmem:[#allocation7 + $0x38] sm:$0xff]
      %v163 = vld [vmem:[%s2] sm:$0xff]
      %v164 = vld [vmem:[%s2 + $0x8] sm:$0xff]
      %v165 = vld [vmem:[%s2 + $0x10] sm:$0xff]
      %v166 = vld [vmem:[%s2 + $0x18] sm:$0xff]
      %v167 = vld [vmem:[%s2 + $0x20] sm:$0xff]
      %v168 = vld [vmem:[%s2 + $0x28] sm:$0xff]
      %v169 = vld [vmem:[%s2 + $0x30] sm:$0xff]
      %v170 = vld [vmem:[%s2 + $0x38] sm:$0xff]
      %v171 = vadd.s32 %v155, %v163
      %v172 = vadd.s32 %v156, %v164
      %v173 = vadd.s32 %v157, %v165
      %v174 = vadd.s32 %v158, %v166
      %v175 = vadd.s32 %v159, %v167
      %v176 = vadd.s32 %v160, %v168
      %v177 = vadd.s32 %v161, %v169
      %v178 = vadd.s32 %v162, %v170
      %v179 = vlaneseq
      %v180 = vshrl.u32 %v179, 7
      %v181 = vadd.s32 %v180, 8
      %v182 = vadd.s32 %v180, 16
      %v183 = vadd.s32 %v180, 24
      %v184 = vadd.s32 %v180, 32
      %v185 = vadd.s32 %v180, 40
      %v186 = vadd.s32 %v180, 48
      %v187 = vadd.s32 %v180, 56
      %s188 = smul.u32 0, 64
      %v189 = vstv %s188
      %v190 = vadd.s32 %v180, %v189
      %v191 = vadd.s32 %v181, %v189
      %v192 = vadd.s32 %v182, %v189
      %v193 = vadd.s32 %v183, %v189
      %v194 = vadd.s32 %v184, %v189
      %v195 = vadd.s32 %v185, %v189
      %v196 = vadd.s32 %v186, %v189
      %v197 = vadd.s32 %v187, %v189
      %vm198 = vcmp.lt.s32.totalorder %v190, 1
      %vm199 = vcmp.lt.s32.totalorder %v191, 1
      %vm200 = vcmp.lt.s32.totalorder %v192, 1
      %vm201 = vcmp.lt.s32.totalorder %v193, 1
      %vm202 = vcmp.lt.s32.totalorder %v194, 1
      %vm203 = vcmp.lt.s32.totalorder %v195, 1
      %vm204 = vcmp.lt.s32.totalorder %v196, 1
      %vm205 = vcmp.lt.s32.totalorder %v197, 1
      %v206 = vsel %vm198, %v147, 0
      %v207 = vsel %vm199, %v148, 0
      %v208 = vsel %vm200, %v149, 0
      %v209 = vsel %vm201, %v150, 0
      %v210 = vsel %vm202, %v151, 0
      %v211 = vsel %vm203, %v152, 0
      %v212 = vsel %vm204, %v153, 0
      %v213 = vsel %vm205, %v154, 0
      %v214 = vsel %vm198, %v171, 0
      %v215 = vsel %vm199, %v172, 0
      %v216 = vsel %vm200, %v173, 0
      %v217 = vsel %vm201, %v174, 0
      %v218 = vsel %vm202, %v175, 0
      %v219 = vsel %vm203, %v176, 0
      %v220 = vsel %vm204, %v177, 0
      %v221 = vsel %vm205, %v178, 0
      %v222 = vld [vmem:[#allocation2] sm:$0xff]
      %v223 = vadd.s32 %v206, %v210
      %v224 = vadd.s32 %v207, %v211
      %v225 = vadd.s32 %v208, %v212
      %v226 = vadd.s32 %v209, %v213
      %v227 = vadd.s32 %v223, %v224
      %v228 = vadd.s32 %v225, %v226
      %v229 = vadd.s32 %v227, %v228
      %v230 = vadd.s32 %v222, %v229
      %231 = vst [vmem:[#allocation2] sm:$0xff] %v230
      %v232 = vld [vmem:[#allocation3] sm:$0xff]
      %v233 = vadd.s32 %v214, %v218
      %v234 = vadd.s32 %v215, %v219
      %v235 = vadd.s32 %v216, %v220
      %v236 = vadd.s32 %v217, %v221
      %v237 = vadd.s32 %v233, %v234
      %v238 = vadd.s32 %v235, %v236
      %v239 = vadd.s32 %v237, %v238
      %v240 = vadd.s32 %v232, %v239
      %241 = vst [vmem:[#allocation3] sm:$0xff] %v240
      %v242 = vld [vmem:[#allocation2] sm:$0xff]
      %v243 = vand.u32 %v242, 65535
      %v244 = vshrl.u32 %v242, 16
      %v245 = vcvt.s32.f32 %v243
      %v246 = vcvt.s32.f32 %v244
      %247 = vadd.xlane.f32.xlu0 %v245
      %v248 = vpop.xlane.xlu0 %247
      %249 = vadd.xlane.f32.xlu0 %v246
      %v250 = vpop.xlane.xlu0 %249
      %v251 = vcvt.f32.s32 %v248
      %v252 = vcvt.f32.s32 %v250
      %v253 = vshll.u32 %v252, 16
      %v254 = vadd.s32 %v253, %v251
      %v255 = vrot.slane %v254, 4
      %v256 = vadd.s32 %v254, %v255
      %v257 = vrot.slane %v256, 2
      %v258 = vadd.s32 %v256, %v257
      %v259 = vrot.slane %v258, 1
      %v260 = vadd.s32 %v258, %v259
      %s261 = vtos %v260
      %s262 = scvt.s32.f32 %s261
      %v263 = vld [vmem:[#allocation3] sm:$0xff]
      %v264 = vand.u32 %v263, 65535
      %v265 = vshrl.u32 %v263, 16
      %v266 = vcvt.s32.f32 %v264
      %v267 = vcvt.s32.f32 %v265
      %268 = vadd.xlane.f32.xlu0 %v266
      %v269 = vpop.xlane.xlu0 %268
      %270 = vadd.xlane.f32.xlu0 %v267
      %v271 = vpop.xlane.xlu0 %270
      %v272 = vcvt.f32.s32 %v269
      %v273 = vcvt.f32.s32 %v271
      %v274 = vshll.u32 %v273, 16
      %v275 = vadd.s32 %v274, %v272
      %v276 = vrot.slane %v275, 4
      %v277 = vadd.s32 %v275, %v276
      %v278 = vrot.slane %v277, 2
      %v279 = vadd.s32 %v277, %v278
      %v280 = vrot.slane %v279, 1
      %v281 = vadd.s32 %v279, %v280
      %s282 = vtos %v281
      %s283 = scvt.s32.f32 %s282
      %s284 = sadd.f32 %s262, %s283
      %p285 = scmp.ne.f32.partialorder %s284, 0.0
      %v286 = vstv %s284
      %v287 = vrcp.pop %v286
      %v288 = vmul.f32 %v286, %v287
      %v289 = vsub.f32 1.0, %v288
      %v290 = vmul.f32 %v287, %v289
      %v291 = vadd.f32 %v287, %v290
      %vm292 = vweird.f32 %v286
      %vm293 = vweird.f32 %v287
      %vm294 = vmor %vm292, %vm293
      %v295 = vsel %vm294, %v287, %v291
      %v296 = vand.u32 2147483647, %v286
      %vm297 = vcmp.eq.f32.partialorder %v296, 8.507059e+37
      %v298 = vand.u32 %v286, 2147483648
      %v299 = vor.u32 1.1754944e-38, %v298
      %v300 = vsel %vm297, %v299, %v295
      %s301 = vtos %v300
      %s302 = smul.f32 %s262, %s301
      %s303 = scalar_select %p285, %s302, 0.0
      %s304 = scalar_lea.smem [#allocation9], 0
      %305 = sst [smem:[%s304]] %s303
    $region37: #{tpu_custom_call.1} parent=1 // pred_fallthru
      _
    // Predicated region
    $region38: #{tpu_custom_call.1} parent=1 // pred_check
      _
    $region39: #{tpu_custom_call.1} parent=1 // pred_check_branch
      %307 = sbr.rel (0) target = $region41
    $region40: #{tpu_custom_call.1} parent=1 // pred_region
      %309 = vsyncadd [#allocation6], 0
      %s311 = sshll.u32 %s4, 4
      %s312 = int_to_ptr.hbm [resolvable:$true] %s311
      %314 = dma.smem_to_hbm [#allocation9], 16, %s312, [#allocation6]
    $region41: #{tpu_custom_call.1} parent=1 // pred_fallthru
      _
    // Predicated region
    $region42: #{tpu_custom_call.1} parent=1 // pred_check
      _
    $region43: #{tpu_custom_call.1} parent=1 // pred_check_branch
      %316 = sbr.rel (0) target = $region45
    $region44: #{tpu_custom_call.1} parent=1 // pred_region
      %318 = dma.done [#allocation6], 16
    $region45: #{tpu_custom_call.1} parent=1 // pred_fallthru
      _
    %319 = sfence
    %320 = vsyncpa [#allocation5], 1
    %321 = vsyncpa [#allocation8], 1
    %322 = vsyncpa [#allocation6], 1

</llo_original>
